<compile_context>
chip_gen: v5e
topology: v5e:2x2
jax: 0.10.0
libtpu: 0.0.40
codegen_flags: <defaults>
</compile_context>

<pallas_src>
import functools

import jax
import jax.numpy as jnp
from jax.experimental import pallas as pl
from jax.experimental.pallas import tpu as pltpu

LANES = 128  # TPU vreg lane width; every packed affine block is LANES x LANES.


def _round_up(n: int, m: int) -> int:
    return ((n + m - 1) // m) * m


def persona_kernel(x_ref, p_ref, out_ref, *, state_dim: int, action_dim: int):
    """Fused forward pass over one batch tile.

    x_ref:   (TB, S) raw state tile.
    p_ref:   (4*128, 128) packed affine blocks (resident across grid steps):
               block 0: encoder Linear 1 (+ ReLU)
               block 1: encoder Linear 2 (+ ReLU)
               block 2: fused value/policy head Linear 1 (+ ReLU)
               block 3: fused block-diagonal head Linear 2
             Each block holds W (in_features x out_features) in its top rows
             and the bias in row 127; all other entries are zero.
    out_ref: (TB, 128); col 0 = value, cols 1..action_dim = softmax policy.
    """
    dt = p_ref.dtype
    x = x_ref[...].astype(dt)                                  # (TB, S)

    # Weight blocks + bias rows (row 127 of each block).
    w1 = p_ref[0:state_dim, :]                                 # (S, 128)
    b1 = p_ref[1 * LANES - 1:1 * LANES, :].astype(jnp.float32)
    w2 = p_ref[1 * LANES:2 * LANES, :]                         # (128, 128)
    b2 = p_ref[2 * LANES - 1:2 * LANES, :].astype(jnp.float32)
    w3 = p_ref[2 * LANES:3 * LANES, :]                         # (128, 128)
    b3 = p_ref[3 * LANES - 1:3 * LANES, :].astype(jnp.float32)
    w4 = p_ref[3 * LANES:4 * LANES, :]                         # (128, 128)
    b4 = p_ref[4 * LANES - 1:4 * LANES, :].astype(jnp.float32)

    # ---- state encoder (bias added on the f32 accumulator, ReLU in f32) ----
    h = jnp.dot(x, w1, preferred_element_type=jnp.float32)
    h = jnp.maximum(h + b1, 0.0).astype(dt)
    h = jnp.dot(h, w2, preferred_element_type=jnp.float32)
    h = jnp.maximum(h + b2, 0.0).astype(dt)

    # ---- fused first Linear of both heads:
    #      cols [0, half) = value branch, cols [half, 2*half) = policy branch.
    hp = jnp.dot(h, w3, preferred_element_type=jnp.float32)
    hp = jnp.maximum(hp + b3, 0.0).astype(dt)

    # ---- fused block-diagonal second Linear: col 0 = value, cols 1..A = logits.
    out = jnp.dot(hp, w4, preferred_element_type=jnp.float32) + b4

    # ---- masked softmax over logit columns only; mask built once at (1, 128).
    col = jax.lax.broadcasted_iota(jnp.int32, (1, LANES), 1)
    is_logit = (col >= 1) & (col <= action_dim)
    masked = jnp.where(is_logit, out, -jnp.inf)
    m = jnp.max(masked, axis=-1, keepdims=True)
    e = jnp.exp(masked - m)                    # exp(-inf) -> 0 on non-logit lanes
    denom = jnp.sum(e, axis=-1, keepdims=True)
    r = pl.reciprocal(denom, approx=True)      # EUP slot (off the VPU path)
    r = r * (2.0 - denom * r)                  # one Newton step -> ~1e-8 rel err
    out_ref[...] = jnp.where(is_logit, e * r, out)


def pack_params(p, dtype=jnp.float32):
    """Pack the 12 Linear weights/biases into one (4*128, 128) operand.

    Weights are stored as (in_features, out_features) so y = x @ W + b (matches
    PyTorch's x @ W.T + b).  Each 128x128 block stores W at
    [0:in, col_off:col_off+out] and its bias in row 127.
    """
    S, H = p["w1"].shape
    half = p["wv1"].shape[1]
    A = p["wp2"].shape[1]
    assert max(S, H, 2 * half, 1 + A) <= LANES - 1, "feature dims must fit in 127 lanes"

    def affine_block(entries):
        blk = jnp.zeros((LANES, LANES), jnp.float32)
        for w, b, row_off, col_off in entries:
            fi, fo = w.shape
            blk = blk.at[row_off:row_off + fi, col_off:col_off + fo].set(w)
            blk = blk.at[LANES - 1, col_off:col_off + fo].set(b.reshape(-1))
        return blk

    blocks = [
        affine_block([(p["w1"], p["b1"], 0, 0)]),
        affine_block([(p["w2"], p["b2"], 0, 0)]),
        # fused head first-layers: value branch -> cols [0, half),
        # policy branch -> cols [half, 2*half)
        affine_block([(p["wv1"], p["bv1"], 0, 0),
                      (p["wp1"], p["bp1"], 0, half)]),
        # fused block-diagonal head second-layers: value -> col 0, logits -> cols 1..A
        affine_block([(p["wv2"], p["bv2"], 0, 0),
                      (p["wp2"], p["bp2"], half, 1)]),
    ]
    return jnp.concatenate(blocks, axis=0).astype(dtype)


def persona_adaptation_net(state, packed_params, action_dim, *, block_batch=512):
    """state (B, state_dim) float -> (value (B, 1), policy (B, action_dim))."""
    B, S = state.shape
    dt = packed_params.dtype
    sub = 16 if dt == jnp.bfloat16 else 8          # sublane packing granularity
    TB = _round_up(min(block_batch, max(B, 1)), sub)
    Bp = _round_up(B, TB)

    x = state.astype(dt)
    if Bp != B:
        x = jnp.pad(x, ((0, Bp - B), (0, 0)))      # only tiny (B, S) rows padded

    flops = 2 * Bp * (S * LANES + 3 * LANES * LANES)
    bytes_accessed = (Bp * S * x.dtype.itemsize
                      + packed_params.size * packed_params.dtype.itemsize
                      + Bp * LANES * 4)

    out = pl.pallas_call(
        functools.partial(persona_kernel, state_dim=S, action_dim=action_dim),
        out_shape=jax.ShapeDtypeStruct((Bp, LANES), jnp.float32),
        grid=(Bp // TB,),
        in_specs=[
            pl.BlockSpec((TB, S), lambda i: (i, 0)),            # streamed batch tile
            pl.BlockSpec((4 * LANES, LANES), lambda i: (0, 0)),  # weights stay resident
        ],
        out_specs=pl.BlockSpec((TB, LANES), lambda i: (i, 0)),
        compiler_params=pltpu.CompilerParams(
            dimension_semantics=("parallel",)),     # megacore sharding on v7x
        cost_estimate=pl.CostEstimate(
            flops=flops,
            transcendentals=Bp * LANES,
            bytes_accessed=bytes_accessed),
    )(x, packed_params)

    value = out[:B, 0:1]                            # wrapper-side slice: free plumbing
    policy = out[:B, 1:1 + action_dim]
    return value, policy


def init_params(key, state_dim, action_dim, hidden_dim=64):
    """Deterministic init mimicking PyTorch's default U(-1/sqrt(fan_in), +1/sqrt(fan_in))."""
    half = hidden_dim // 2

    def linear(k, fan_in, fan_out):
        kw, kb = jax.random.split(k)
        bound = 1.0 / jnp.sqrt(jnp.float32(fan_in))
        w = jax.random.uniform(kw, (fan_in, fan_out), jnp.float32, -bound, bound)
        b = jax.random.uniform(kb, (1, fan_out), jnp.float32, -bound, bound)
        return w, b

    keys = jax.random.split(key, 6)
    w1, b1 = linear(keys[0], state_dim, hidden_dim)
    w2, b2 = linear(keys[1], hidden_dim, hidden_dim)
    wv1, bv1 = linear(keys[2], hidden_dim, half)
    wv2, bv2 = linear(keys[3], half, 1)
    wp1, bp1 = linear(keys[4], hidden_dim, half)
    wp2, bp2 = linear(keys[5], half, action_dim)
    return dict(
        w1=w1, b1=b1, w2=w2, b2=b2,
        wv1=wv1, bv1=bv1, wv2=wv2, bv2=bv2,
        wp1=wp1, bp1=bp1, wp2=wp2, bp2=bp2,
    )


def reference_forward(state, p):
    """Pure-JAX reference matching the PyTorch forward."""
    h = jnp.maximum(state @ p["w1"] + p["b1"], 0.0)
    h = jnp.maximum(h @ p["w2"] + p["b2"], 0.0)
    v = jnp.maximum(h @ p["wv1"] + p["bv1"], 0.0)
    value = v @ p["wv2"] + p["bv2"]
    q = jnp.maximum(h @ p["wp1"] + p["bp1"], 0.0)
    logits = q @ p["wp2"] + p["bp2"]
    policy = jax.nn.softmax(logits, axis=1)
    return value, policy


if __name__ == "__main__":
    state_dim = 16
    action_dim = 8
    hidden_dim = 32

    key = jax.random.PRNGKey(0)
    k_params, k_state, k_big = jax.random.split(key, 3)
    params = init_params(k_params, state_dim, action_dim, hidden_dim)
    packed = pack_params(params)                    # one-time host-side packing (f32 path)

    # Small batch: single grid step.
    state = jax.random.normal(k_state, (8, state_dim), jnp.float32)
    value, policy = persona_adaptation_net(state, packed, action_dim)
    jax.block_until_ready((value, policy))
    ref_value, ref_policy = reference_forward(state, params)
    assert value.shape == (8, 1) and policy.shape == (8, action_dim)
    assert jnp.allclose(value, ref_value, atol=1e-5, rtol=1e-5)
    assert jnp.allclose(policy, ref_policy, atol=1e-5, rtol=1e-5)
    assert jnp.allclose(jnp.sum(policy, axis=1), 1.0, atol=1e-5)

    # Larger streamed batch: multi-step pipelined grid (exercises padding too).
    big_state = jax.random.normal(k_big, (1000, state_dim), jnp.float32)
    v_big, p_big = persona_adaptation_net(big_state, packed, action_dim, block_batch=512)
    jax.block_until_ready((v_big, p_big))
    rv_big, rp_big = reference_forward(big_state, params)
    assert v_big.shape == (1000, 1) and p_big.shape == (1000, action_dim)
    assert jnp.allclose(v_big, rv_big, atol=1e-4, rtol=1e-4)
    assert jnp.allclose(p_big, rp_big, atol=1e-4, rtol=1e-4)
    assert jnp.allclose(jnp.sum(p_big, axis=1), 1.0, atol=1e-4)

    print("KERNEL_OK")
</pallas_src>

<mosaic_0001>
module attributes {stable_mosaic.version = 11 : i64} {
  func.func @persona_kernel(%arg0: i32, %arg1: memref<8x16xf32, #tpu.memory_space<vmem>>, %arg2: memref<512x128xf32, #tpu.memory_space<vmem>>, %arg3: memref<8x128xf32, #tpu.memory_space<vmem>>) attributes {dimension_semantics = [#tpu.dimension_semantics<parallel>], iteration_bounds = array<i64: 1>, scalar_prefetch = 0 : i64, scratch_operands = 0 : i64, tpu.core_type = #tpu.core_type<tc>, window_params = [{transform_indices = @transform_0, window_bounds = array<i64: 8, 16>}, {pipeline_mode = #tpu.pipeline_mode<synchronous>, transform_indices = @transform_1, window_bounds = array<i64: 512, 128>}, {transform_indices = @transform_2, window_bounds = array<i64: 8, 128>}]} {
    %c0 = arith.constant 0 : index
    %c0_0 = arith.constant 0 : index
    %0 = vector.load %arg1[%c0, %c0_0] : memref<8x16xf32, #tpu.memory_space<vmem>>, vector<8x16xf32>
    %c0_1 = arith.constant 0 : index
    %c0_2 = arith.constant 0 : index
    %1 = vector.load %arg2[%c0_1, %c0_2] : memref<512x128xf32, #tpu.memory_space<vmem>>, vector<16x128xf32>
    %c127 = arith.constant 127 : index
    %c0_3 = arith.constant 0 : index
    %2 = vector.load %arg2[%c127, %c0_3] : memref<512x128xf32, #tpu.memory_space<vmem>>, vector<1x128xf32>
    %c128 = arith.constant 128 : index
    %c0_4 = arith.constant 0 : index
    %3 = vector.load %arg2[%c128, %c0_4] : memref<512x128xf32, #tpu.memory_space<vmem>>, vector<128x128xf32>
    %c255 = arith.constant 255 : index
    %c0_5 = arith.constant 0 : index
    %4 = vector.load %arg2[%c255, %c0_5] : memref<512x128xf32, #tpu.memory_space<vmem>>, vector<1x128xf32>
    %c256 = arith.constant 256 : index
    %c0_6 = arith.constant 0 : index
    %5 = vector.load %arg2[%c256, %c0_6] : memref<512x128xf32, #tpu.memory_space<vmem>>, vector<128x128xf32>
    %c383 = arith.constant 383 : index
    %c0_7 = arith.constant 0 : index
    %6 = vector.load %arg2[%c383, %c0_7] : memref<512x128xf32, #tpu.memory_space<vmem>>, vector<1x128xf32>
    %c384 = arith.constant 384 : index
    %c0_8 = arith.constant 0 : index
    %7 = vector.load %arg2[%c384, %c0_8] : memref<512x128xf32, #tpu.memory_space<vmem>>, vector<128x128xf32>
    %c511 = arith.constant 511 : index
    %c0_9 = arith.constant 0 : index
    %8 = vector.load %arg2[%c511, %c0_9] : memref<512x128xf32, #tpu.memory_space<vmem>>, vector<1x128xf32>
    %cst = arith.constant dense<0.000000e+00> : vector<8x128xf32>
    %9 = tpu.matmul %0, %1, %cst {dimension_numbers = #tpu.dot_dimension_numbers<[1], [0], [0], [1], [0, 0, 1, 1], [], []>} : vector<8x16xf32>, vector<16x128xf32>, vector<8x128xf32> -> vector<8x128xf32>
    %10 = vector.broadcast %2 : vector<1x128xf32> to vector<8x128xf32>
    %11 = arith.addf %9, %10 : vector<8x128xf32>
    %cst_10 = arith.constant 0.000000e+00 : f32
    %12 = vector.broadcast %cst_10 : f32 to vector<8x128xf32>
    %13 = arith.maximumf %11, %12 : vector<8x128xf32>
    %cst_11 = arith.constant dense<0.000000e+00> : vector<8x128xf32>
    %14 = tpu.matmul %13, %3, %cst_11 {dimension_numbers = #tpu.dot_dimension_numbers<[1], [0], [0], [1], [0, 0, 1, 1], [], []>} : vector<8x128xf32>, vector<128x128xf32>, vector<8x128xf32> -> vector<8x128xf32>
    %15 = vector.broadcast %4 : vector<1x128xf32> to vector<8x128xf32>
    %16 = arith.addf %14, %15 : vector<8x128xf32>
    %cst_12 = arith.constant 0.000000e+00 : f32
    %17 = vector.broadcast %cst_12 : f32 to vector<8x128xf32>
    %18 = arith.maximumf %16, %17 : vector<8x128xf32>
    %cst_13 = arith.constant dense<0.000000e+00> : vector<8x128xf32>
    %19 = tpu.matmul %18, %5, %cst_13 {dimension_numbers = #tpu.dot_dimension_numbers<[1], [0], [0], [1], [0, 0, 1, 1], [], []>} : vector<8x128xf32>, vector<128x128xf32>, vector<8x128xf32> -> vector<8x128xf32>
    %20 = vector.broadcast %6 : vector<1x128xf32> to vector<8x128xf32>
    %21 = arith.addf %19, %20 : vector<8x128xf32>
    %cst_14 = arith.constant 0.000000e+00 : f32
    %22 = vector.broadcast %cst_14 : f32 to vector<8x128xf32>
    %23 = arith.maximumf %21, %22 : vector<8x128xf32>
    %cst_15 = arith.constant dense<0.000000e+00> : vector<8x128xf32>
    %24 = tpu.matmul %23, %7, %cst_15 {dimension_numbers = #tpu.dot_dimension_numbers<[1], [0], [0], [1], [0, 0, 1, 1], [], []>} : vector<8x128xf32>, vector<128x128xf32>, vector<8x128xf32> -> vector<8x128xf32>
    %25 = vector.broadcast %8 : vector<1x128xf32> to vector<8x128xf32>
    %26 = arith.addf %24, %25 : vector<8x128xf32>
    %27 = tpu.iota {dimensions = array<i32: 1>} : vector<1x128xi32>
    %c1_i32 = arith.constant 1 : i32
    %28 = vector.broadcast %c1_i32 : i32 to vector<1x128xi32>
    %29 = arith.cmpi sge, %27, %28 : vector<1x128xi32>
    %c8_i32 = arith.constant 8 : i32
    %30 = vector.broadcast %c8_i32 : i32 to vector<1x128xi32>
    %31 = arith.cmpi sle, %27, %30 : vector<1x128xi32>
    %32 = arith.andi %29, %31 : vector<1x128xi1>
    %cst_16 = arith.constant 0xFF800000 : f32
    %33 = vector.shape_cast %32 : vector<1x128xi1> to vector<1x128xi1>
    %34 = vector.broadcast %33 : vector<1x128xi1> to vector<8x128xi1>
    %35 = vector.broadcast %cst_16 : f32 to vector<8x128xf32>
    %36 = arith.select %34, %26, %35 : vector<8x128xi1>, vector<8x128xf32>
    %cst_17 = arith.constant dense<0xFF800000> : vector<8xf32>
    %37 = vector.multi_reduction <maximumf>, %36, %cst_17 [1] : vector<8x128xf32> to vector<8xf32>
    %38 = vector.shape_cast %37 : vector<8xf32> to vector<8x1xf32>
    %39 = vector.broadcast %38 : vector<8x1xf32> to vector<8x128xf32>
    %40 = arith.subf %36, %39 : vector<8x128xf32>
    %41 = math.exp %40 : vector<8x128xf32>
    %cst_18 = arith.constant dense<0.000000e+00> : vector<8xf32>
    %42 = vector.multi_reduction <add>, %41, %cst_18 [1] : vector<8x128xf32> to vector<8xf32>
    %43 = vector.shape_cast %42 : vector<8xf32> to vector<8x1xf32>
    %44 = tpu.reciprocal %43 {approx = true} : vector<8x1xf32> -> vector<8x1xf32>
    %45 = arith.mulf %43, %44 : vector<8x1xf32>
    %cst_19 = arith.constant 2.000000e+00 : f32
    %46 = vector.broadcast %cst_19 : f32 to vector<8x1xf32>
    %47 = arith.subf %46, %45 : vector<8x1xf32>
    %48 = arith.mulf %44, %47 : vector<8x1xf32>
    %49 = vector.broadcast %48 : vector<8x1xf32> to vector<8x128xf32>
    %50 = arith.mulf %41, %49 : vector<8x128xf32>
    %51 = vector.shape_cast %32 : vector<1x128xi1> to vector<1x128xi1>
    %52 = vector.broadcast %51 : vector<1x128xi1> to vector<8x128xi1>
    %53 = arith.select %52, %50, %26 : vector<8x128xi1>, vector<8x128xf32>
    %c0_20 = arith.constant 0 : index
    %c0_21 = arith.constant 0 : index
    %54 = vector.load %arg3[%c0_20, %c0_21] : memref<8x128xf32, #tpu.memory_space<vmem>>, vector<8x128xf32>
    tpu.vector_store %arg3[%c0_20, %c0_21], %53 {strides = array<i32>} : memref<8x128xf32, #tpu.memory_space<vmem>>, vector<8x128xf32>,
    return
  }
  func.func @transform_0(%arg0: i32) -> (i32, i32) {
    %c0_i32 = arith.constant 0 : i32
    %c0_i32_0 = arith.constant 0 : i32
    return %arg0, %c0_i32 : i32, i32
  }
  func.func @transform_1(%arg0: i32) -> (i32, i32) {
    %c0_i32 = arith.constant 0 : i32
    %c0_i32_0 = arith.constant 0 : i32
    %c0_i32_1 = arith.constant 0 : i32
    return %c0_i32, %c0_i32_0 : i32, i32
  }
  func.func @transform_2(%arg0: i32) -> (i32, i32) {
    %c0_i32 = arith.constant 0 : i32
    %c0_i32_0 = arith.constant 0 : i32
    return %arg0, %c0_i32 : i32, i32
  }
}

</mosaic_0001>

<llo_original>
// kernel: tpu_custom_call.1
$region0: #{tpu_custom_call.1}
  #allocation0 [shape = 'u32[]', space=smem, size = 0x4, offset = 0x4, fixed_abs, tag = 'smem constant byte address 0x4 - core index']
  #allocation1 [shape = 'u32[72,128]{1,0:T(1,128)}', space=vmem, size = 0x9000, scoped, tag = 'internal scratch']
  %s0 = inlined_call_operand.hbm [shape: f32[8,16], index: 0, kind: input, shape index: {}]
  %s1 = inlined_call_operand.hbm [shape: f32[512,128], index: 1, kind: input, shape index: {}]
  %s2 = inlined_call_operand.hbm [shape: f32[8,128], index: 2, kind: output, shape index: {}]
  %s3 = sld [smem:[#allocation0]]
  $region26: #{tpu_custom_call.1} parent=0
    _
  %s5 = ssub.s32 1, %s3
  %s6 = scalar_select 0, %s5, %s3
  $region1: #{tpu_custom_call.1} parent=0
    #allocation2 [shape = 'u8[4096]{0}', space=vmem, size = 0x1000, scoped, tag = 'input window, operand 0, single buffered']
    #allocation3 [shape = 's32[1]{0}', space=sflag, size = 0x4, scoped, tag = 'scoped memory for tpu_custom_call.1']
    #allocation4 [shape = 's32[1]{0}', space=sflag, size = 0x4, scoped, tag = 'scoped memory for tpu_custom_call.1']
    #allocation5 [shape = 'u8[262144]{0}', space=vmem, size = 0x40000, scoped, tag = 'input window, operand 1, single buffered']
    #allocation6 [shape = 's32[1]{0}', space=sflag, size = 0x4, scoped, tag = 'scoped memory for tpu_custom_call.1']
    #allocation7 [shape = 'u8[4096]{0}', space=vmem, size = 0x1000, scoped, tag = 'output window, operand 0, single buffered']
    %7 = vsyncpa [#allocation3], 0
    %8 = vsyncpa [#allocation6], 0
    %9 = vsyncpa [#allocation4], 0
    // Predicated region
    $region2: #{tpu_custom_call.1} parent=1 // pred_check
      _
    $region3: #{tpu_custom_call.1} parent=1 // pred_check_branch
      %11 = sbr.rel (0) target = $region5
    $region4: #{tpu_custom_call.1} parent=1 // pred_region
      %13 = vsyncadd [#allocation3], 0
      %s15 = sshll.u32 %s0, 4
      %s16 = int_to_ptr.hbm [resolvable:$true] %s15
      %s17 = sshll.u32 [#allocation2], 4
      %s18 = int_to_ptr.vmem [resolvable:$true] %s17
      %20 = dma.hbm_to_vmem [thread:$0]  %s16, 128, %s18, [#allocation3]
    $region5: #{tpu_custom_call.1} parent=1 // pred_fallthru
      _
    // Predicated region
    $region6: #{tpu_custom_call.1} parent=1 // pred_check
      _
    $region7: #{tpu_custom_call.1} parent=1 // pred_check_branch
      %22 = sbr.rel (0) target = $region9
    $region8: #{tpu_custom_call.1} parent=1 // pred_region
      %24 = vsyncadd [#allocation6], 0
      %s25 = sshll.u32 %s1, 4
      %s26 = int_to_ptr.hbm [resolvable:$true] %s25
      %s27 = sshll.u32 [#allocation5], 4
      %s28 = int_to_ptr.vmem [resolvable:$true] %s27
      %33 = dma.hbm_to_vmem [thread:$0]  %s26, 8192, %s28, [#allocation6], 128, 128, 8
    $region9: #{tpu_custom_call.1} parent=1 // pred_fallthru
      _
    // Predicated region
    $region10: #{tpu_custom_call.1} parent=1 // pred_check
      _
    $region11: #{tpu_custom_call.1} parent=1 // pred_check_branch
      %35 = sbr.rel (0) target = $region13
    $region12: #{tpu_custom_call.1} parent=1 // pred_region
      %37 = dma.done [#allocation3], 128
    $region13: #{tpu_custom_call.1} parent=1 // pred_fallthru
      _
    // Predicated region
    $region14: #{tpu_custom_call.1} parent=1 // pred_check
      _
    $region15: #{tpu_custom_call.1} parent=1 // pred_check_branch
      %39 = sbr.rel (0) target = $region17
    $region16: #{tpu_custom_call.1} parent=1 // pred_region
      %41 = dma.done [#allocation6], 8192
    $region17: #{tpu_custom_call.1} parent=1 // pred_fallthru
      _
    %v42 = vld [vmem:[#allocation2] sm:$0xff]
    %v43 = vld [vmem:[#allocation5] sm:$0xff]
    %v44 = vld [vmem:[#allocation5 + $0x8] sm:$0xff]
    %v45 = vld [vmem:[#allocation5 + $0x7f] sm:$0x1]
    %v46 = vld [vmem:[#allocation5 + $0x80] sm:$0xff]
    %v47 = vld [vmem:[#allocation5 + $0x88] sm:$0xff]
    %v48 = vld [vmem:[#allocation5 + $0x90] sm:$0xff]
    %v49 = vld [vmem:[#allocation5 + $0x98] sm:$0xff]
    %v50 = vld [vmem:[#allocation5 + $0xa0] sm:$0xff]
    %v51 = vld [vmem:[#allocation5 + $0xa8] sm:$0xff]
    %v52 = vld [vmem:[#allocation5 + $0xb0] sm:$0xff]
    %v53 = vld [vmem:[#allocation5 + $0xb8] sm:$0xff]
    %v54 = vld [vmem:[#allocation5 + $0xc0] sm:$0xff]
    %v55 = vld [vmem:[#allocation5 + $0xc8] sm:$0xff]
    %v56 = vld [vmem:[#allocation5 + $0xd0] sm:$0xff]
    %v57 = vld [vmem:[#allocation5 + $0xd8] sm:$0xff]
    %v58 = vld [vmem:[#allocation5 + $0xe0] sm:$0xff]
    %v59 = vld [vmem:[#allocation5 + $0xe8] sm:$0xff]
    %v60 = vld [vmem:[#allocation5 + $0xf0] sm:$0xff]
    %v61 = vld [vmem:[#allocation5 + $0xf8] sm:$0xff]
    %v62 = vld [vmem:[#allocation5 + $0xff] sm:$0x1]
    %v63 = vld [vmem:[#allocation5 + $0x100] sm:$0xff]
    %v64 = vld [vmem:[#allocation5 + $0x108] sm:$0xff]
    %v65 = vld [vmem:[#allocation5 + $0x110] sm:$0xff]
    %v66 = vld [vmem:[#allocation5 + $0x118] sm:$0xff]
    %v67 = vld [vmem:[#allocation5 + $0x120] sm:$0xff]
    %v68 = vld [vmem:[#allocation5 + $0x128] sm:$0xff]
    %v69 = vld [vmem:[#allocation5 + $0x130] sm:$0xff]
    %v70 = vld [vmem:[#allocation5 + $0x138] sm:$0xff]
    %v71 = vld [vmem:[#allocation5 + $0x140] sm:$0xff]
    %v72 = vld [vmem:[#allocation5 + $0x148] sm:$0xff]
    %v73 = vld [vmem:[#allocation5 + $0x150] sm:$0xff]
    %v74 = vld [vmem:[#allocation5 + $0x158] sm:$0xff]
    %v75 = vld [vmem:[#allocation5 + $0x160] sm:$0xff]
    %v76 = vld [vmem:[#allocation5 + $0x168] sm:$0xff]
    %v77 = vld [vmem:[#allocation5 + $0x170] sm:$0xff]
    %v78 = vld [vmem:[#allocation5 + $0x178] sm:$0xff]
    %v79 = vld [vmem:[#allocation5 + $0x17f] sm:$0x1]
    %v80 = vld [vmem:[#allocation5 + $0x180] sm:$0xff]
    %v81 = vld [vmem:[#allocation5 + $0x188] sm:$0xff]
    %v82 = vld [vmem:[#allocation5 + $0x190] sm:$0xff]
    %v83 = vld [vmem:[#allocation5 + $0x198] sm:$0xff]
    %v84 = vld [vmem:[#allocation5 + $0x1a0] sm:$0xff]
    %v85 = vld [vmem:[#allocation5 + $0x1a8] sm:$0xff]
    %v86 = vld [vmem:[#allocation5 + $0x1b0] sm:$0xff]
    %v87 = vld [vmem:[#allocation5 + $0x1b8] sm:$0xff]
    %v88 = vld [vmem:[#allocation5 + $0x1c0] sm:$0xff]
    %v89 = vld [vmem:[#allocation5 + $0x1c8] sm:$0xff]
    %v90 = vld [vmem:[#allocation5 + $0x1d0] sm:$0xff]
    %v91 = vld [vmem:[#allocation5 + $0x1d8] sm:$0xff]
    %v92 = vld [vmem:[#allocation5 + $0x1e0] sm:$0xff]
    %v93 = vld [vmem:[#allocation5 + $0x1e8] sm:$0xff]
    %v94 = vld [vmem:[#allocation5 + $0x1f0] sm:$0xff]
    %v95 = vld [vmem:[#allocation5 + $0x1f8] sm:$0xff]
    %v96 = vld [vmem:[#allocation5 + $0x1ff] sm:$0x1]
    %v97 = vperm.slane %v45, 0
    %vm98 = vcmask 130048
    %v100 = vsel %vm98, %v42, 0
    %102 = vmatpush.msra.mxu0 0.0
    %103 = vmatpush.msra.mxu0 0.0
    %104 = vmatpush.msra.mxu0 0.0
    %105 = vmatpush.msra.mxu0 0.0
    %106 = vmatpush.msra.mxu0 0.0
    %107 = vmatpush.msra.mxu0 0.0
    %108 = vmatpush.msra.mxu0 0.0
    %109 = vmatpush.msra.mxu0 0.0
    %110 = vmatpush.msra.mxu0 0.0
    %111 = vmatpush.msra.mxu0 0.0
    %112 = vmatpush.msra.mxu0 0.0
    %113 = vmatpush.msra.mxu0 0.0
    %114 = vmatpush.msra.mxu0 0.0
    %115 = vmatpush.msra.mxu0 0.0
    %116 = vmatpush.msra.mxu0 %v44
    %117 = vmatpush.msra.mxu0 %v43
    %118 = vmatmul.f32.gmra.mxu0 %v100
    %v119 = vpop.f32.mrf.mxu0
    %v120 = vadd.f32 %v97, %v119
    %121 = vdwg.mxu0
    %v122 = vmax.f32 %v120, 0.0
    %v123 = vperm.slane %v62, 0
    %124 = vmatpush.msra.mxu0 %v61
    %125 = vmatpush.msra.mxu0 %v60
    %126 = vmatpush.msra.mxu0 %v59
    %127 = vmatpush.msra.mxu0 %v58
    %128 = vmatpush.msra.mxu0 %v57
    %129 = vmatpush.msra.mxu0 %v56
    %130 = vmatpush.msra.mxu0 %v55
    %131 = vmatpush.msra.mxu0 %v54
    %132 = vmatpush.msra.mxu0 %v53
    %133 = vmatpush.msra.mxu0 %v52
    %134 = vmatpush.msra.mxu0 %v51
    %135 = vmatpush.msra.mxu0 %v50
    %136 = vmatpush.msra.mxu0 %v49
    %137 = vmatpush.msra.mxu0 %v48
    %138 = vmatpush.msra.mxu0 %v47
    %139 = vmatpush.msra.mxu0 %v46
    %140 = vmatmul.f32.gmra.mxu0 %v122
    %v141 = vpop.f32.mrf.mxu0
    %v142 = vadd.f32 %v123, %v141
    %143 = vdwg.mxu0
    %v144 = vmax.f32 %v142, 0.0
    %v145 = vperm.slane %v79, 0
    %146 = vmatpush.msra.mxu0 %v78
    %147 = vmatpush.msra.mxu0 %v77
    %148 = vmatpush.msra.mxu0 %v76
    %149 = vmatpush.msra.mxu0 %v75
    %150 = vmatpush.msra.mxu0 %v74
    %151 = vmatpush.msra.mxu0 %v73
    %152 = vmatpush.msra.mxu0 %v72
    %153 = vmatpush.msra.mxu0 %v71
    %154 = vmatpush.msra.mxu0 %v70
    %155 = vmatpush.msra.mxu0 %v69
    %156 = vmatpush.msra.mxu0 %v68
    %157 = vmatpush.msra.mxu0 %v67
    %158 = vmatpush.msra.mxu0 %v66
    %159 = vmatpush.msra.mxu0 %v65
    %160 = vmatpush.msra.mxu0 %v64
    %161 = vmatpush.msra.mxu0 %v63
    %162 = vmatmul.f32.gmra.mxu0 %v144
    %v163 = vpop.f32.mrf.mxu0
    %v164 = vadd.f32 %v145, %v163
    %165 = vdwg.mxu0
    %v166 = vmax.f32 %v164, 0.0
    %v167 = vperm.slane %v96, 0
    %168 = vmatpush.msra.mxu0 %v95
    %169 = vmatpush.msra.mxu0 %v94
    %170 = vmatpush.msra.mxu0 %v93
    %171 = vmatpush.msra.mxu0 %v92
    %172 = vmatpush.msra.mxu0 %v91
    %173 = vmatpush.msra.mxu0 %v90
    %174 = vmatpush.msra.mxu0 %v89
    %175 = vmatpush.msra.mxu0 %v88
    %176 = vmatpush.msra.mxu0 %v87
    %177 = vmatpush.msra.mxu0 %v86
    %178 = vmatpush.msra.mxu0 %v85
    %179 = vmatpush.msra.mxu0 %v84
    %180 = vmatpush.msra.mxu0 %v83
    %181 = vmatpush.msra.mxu0 %v82
    %182 = vmatpush.msra.mxu0 %v81
    %183 = vmatpush.msra.mxu0 %v80
    %184 = vmatmul.f32.gmra.mxu0 %v166
    %v185 = vpop.f32.mrf.mxu0
    %v186 = vadd.f32 %v167, %v185
    %187 = vdwg.mxu0
    %v188 = vlaneseq
    %v189 = vand.u32 %v188, 127
    %vm190 = vcmp.ge.s32.totalorder %v189, 1
    %vm191 = vcmp.le.s32.totalorder %v189, 8
    %vm192 = vmand %vm190, %vm191
    %v193 = vsel %vm192, 1, 0
    %vm194 = vcmp.eq.s32.totalorder %v193, 1
    %v195 = vsel %vm194, %v186, -inf
    %196 = vmax.xlane.f32.xlu0 %v195
    %v197 = vpop.xlane.xlu0 %196
    %v198 = vsub.f32 %v195, %v197
    %v199 = vmul.f32 %v198, 1.442695
    %v200 = vpow.pop %v199
    %201 = vadd.xlane.f32.xlu0 %v200
    %v202 = vpop.xlane.xlu0 %201
    %v203 = vrcp.pop %v202
    %v204 = vmul.f32 %v202, %v203
    %v205 = vsub.f32 2.0, %v204
    %v206 = vmul.f32 %v203, %v205
    %v207 = vmul.f32 %v200, %v206
    %v208 = vsel %vm194, %v207, %v186
    %209 = vst [vmem:[#allocation7] sm:$0xff] %v208
    // Predicated region
    $region18: #{tpu_custom_call.1} parent=1 // pred_check
      _
    $region19: #{tpu_custom_call.1} parent=1 // pred_check_branch
      %211 = sbr.rel (0) target = $region21
    $region20: #{tpu_custom_call.1} parent=1 // pred_region
      %213 = vsyncadd [#allocation4], 0
      %s215 = sshll.u32 [#allocation7], 4
      %s216 = int_to_ptr.vmem [resolvable:$true] %s215
      %s217 = sshll.u32 %s2, 4
      %s218 = int_to_ptr.hbm [resolvable:$true] %s217
      %220 = dma.vmem_to_hbm [thread:$0]  %s216, 128, %s218, [#allocation4]
    $region21: #{tpu_custom_call.1} parent=1 // pred_fallthru
      _
    // Predicated region
    $region22: #{tpu_custom_call.1} parent=1 // pred_check
      _
    $region23: #{tpu_custom_call.1} parent=1 // pred_check_branch
      %222 = sbr.rel (0) target = $region25
    $region24: #{tpu_custom_call.1} parent=1 // pred_region
      %224 = dma.done [#allocation4], 128
    $region25: #{tpu_custom_call.1} parent=1 // pred_fallthru
      _
    %225 = vsyncpa [#allocation3], 1
    %226 = vsyncpa [#allocation6], 1
    %227 = vsyncpa [#allocation4], 1

</llo_original>
